<compile_context>
chip_gen: v7x
topology: tpu7x:2x2x1
jax: 0.10.0
libtpu: 0.0.40
codegen_flags: <defaults>
</compile_context>

<pallas_src>
import jax
import jax.numpy as jnp
from jax import lax
from jax.experimental import pallas as pl
from jax.experimental.pallas import tpu as pltpu


def _attention_head_kernel(x_ref, wq_ref, wk_ref, wv_ref, wproj_ref, b_ref,
                           o_ref, acc_ref):
    # One grid step == one (batch, head) pair.
    #   x_ref     : (N, C)   compute dtype (bf16 by default)
    #   wq_ref    : (C, hd)  pre-scaled by head_dim**-0.5
    #   wk_ref    : (C, hd)
    #   wv_ref    : (C, hd)
    #   wproj_ref : (hd, C)  head h's rows of Wproj.T
    #   b_ref     : (1, C)   f32 projection bias
    #   o_ref     : (N, C)   output block (resident across the head axis)
    #   acc_ref   : (N, C)   f32 VMEM accumulator scratch
    h = pl.program_id(1)
    cdt = x_ref.dtype

    x = x_ref[...]                                                   # (N, C)

    # Per-head Q/K/V projections (softmax scale folded into wq on the host).
    q = jnp.dot(x, wq_ref[...], preferred_element_type=cdt)          # (N, hd)
    k = jnp.dot(x, wk_ref[...], preferred_element_type=cdt)          # (N, hd)
    v = jnp.dot(x, wv_ref[...], preferred_element_type=cdt)          # (N, hd)

    # Scores: contract the LAST axis of both operands (no in-kernel transpose).
    s = lax.dot_general(q, k, (((1,), (1,)), ((), ())),
                        preferred_element_type=jnp.float32)          # (N, N)

    # Softmax in f32 (v5e has no bf16 VPU/EUP; exact reciprocal is free).
    s = s - jnp.max(s, axis=-1, keepdims=True)
    p = jnp.exp(s)
    p = p * pl.reciprocal(jnp.sum(p, axis=-1, keepdims=True), approx=False)

    ctx = jnp.dot(p.astype(cdt), v, preferred_element_type=cdt)      # (N, hd)

    # Per-head output projection, accumulated over heads (== concat_heads @ Wproj.T).
    out_h = jnp.dot(ctx, wproj_ref[...],
                    preferred_element_type=jnp.float32)              # (N, C)

    @pl.when(h == 0)
    def _():
        acc_ref[...] = jnp.zeros_like(acc_ref)

    acc_ref[...] += out_h

    @pl.when(h == pl.num_programs(1) - 1)
    def _():
        o_ref[...] = (acc_ref[...] + b_ref[...]).astype(o_ref.dtype)


def _vmem_limit_bytes(per_step_bytes: int) -> int:
    """Explicit VMEM budget: 2x (double buffering) + compiler headroom, capped
    at 80% of this generation's capacity (v7x only has 64 MiB)."""
    try:
        cap = int(pltpu.get_tpu_info().vmem_capacity_bytes)
    except Exception:
        cap = 64 * 1024 * 1024   # v7x-safe fallback
    want = 2 * per_step_bytes + (4 << 20)
    return int(max(16 << 20, min(want, int(cap * 0.8))))


def attention_pallas(x, wqkv, wproj, bproj, *, num_heads: int,
                     mxu_dtype=jnp.bfloat16):
    B, N, C = x.shape
    if C % num_heads != 0:
        raise ValueError("C must be divisible by num_heads")
    hd = C // num_heads
    if wqkv.shape != (3 * C, C) or wproj.shape != (C, C) or bproj.shape != (C,):
        raise ValueError("unexpected weight shapes")
    scale = hd ** (-0.5)

    # --- Host-side weight prep: pre-transpose, pre-scale, per-head split -----
    wqkv_t = wqkv.T                                                  # (C, 3C)
    wq_h = (wqkv_t[:, 0 * C:1 * C] * scale).reshape(C, num_heads, hd)
    wk_h = wqkv_t[:, 1 * C:2 * C].reshape(C, num_heads, hd)
    wv_h = wqkv_t[:, 2 * C:3 * C].reshape(C, num_heads, hd)
    wq_h = wq_h.transpose(1, 0, 2).astype(mxu_dtype)                 # (H, C, hd)
    wk_h = wk_h.transpose(1, 0, 2).astype(mxu_dtype)                 # (H, C, hd)
    wv_h = wv_h.transpose(1, 0, 2).astype(mxu_dtype)                 # (H, C, hd)
    wproj_h = wproj.T.reshape(num_heads, hd, C).astype(mxu_dtype)    # (H, hd, C)
    bias2d = bproj.reshape(1, C).astype(jnp.float32)                 # (1, C)
    x_c = x.astype(mxu_dtype)                                        # (B, N, C)

    itemsize = jnp.dtype(mxu_dtype).itemsize
    per_step = (N * C * itemsize                # x block
                + 3 * C * hd * itemsize         # wq / wk / wv slabs
                + hd * C * itemsize             # wproj slab
                + C * 4                         # bias
                + N * C * jnp.dtype(x.dtype).itemsize   # output block
                + N * C * 4)                    # f32 accumulator scratch

    out = pl.pallas_call(
        _attention_head_kernel,
        out_shape=jax.ShapeDtypeStruct((B, N, C), x.dtype),
        grid_spec=pltpu.PrefetchScalarGridSpec(
            num_scalar_prefetch=0,
            grid=(B, num_heads),
            in_specs=[
                pl.BlockSpec((None, N, C), lambda b, h: (b, 0, 0)),    # x rows
                pl.BlockSpec((None, C, hd), lambda b, h: (h, 0, 0)),   # Wq head h
                pl.BlockSpec((None, C, hd), lambda b, h: (h, 0, 0)),   # Wk head h
                pl.BlockSpec((None, C, hd), lambda b, h: (h, 0, 0)),   # Wv head h
                pl.BlockSpec((None, hd, C), lambda b, h: (h, 0, 0)),   # Wproj head h
                pl.BlockSpec((1, C), lambda b, h: (0, 0)),             # bias
            ],
            out_specs=pl.BlockSpec((None, N, C), lambda b, h: (b, 0, 0)),
            scratch_shapes=[pltpu.VMEM((N, C), jnp.float32)],
        ),
        compiler_params=pltpu.CompilerParams(
            dimension_semantics=("parallel", "arbitrary"),
            vmem_limit_bytes=_vmem_limit_bytes(per_step)),
    )(x_c, wq_h, wk_h, wv_h, wproj_h, bias2d)

    return out


def attention_reference(x, wqkv, wproj, bproj, *, num_heads: int):
    """Pure-JAX reference mirroring the PyTorch forward (eval mode)."""
    B, N, C = x.shape
    hd = C // num_heads
    scale = hd ** (-0.5)
    qkv = jnp.einsum("bnc,oc->bno", x, wqkv)                      # (B, N, 3C)
    qkv = qkv.reshape(B, N, 3, num_heads, hd).transpose(2, 0, 3, 1, 4)
    q, k, v = qkv[0], qkv[1], qkv[2]                              # (B, H, N, hd)
    attn = jnp.einsum("bhnd,bhmd->bhnm", q, k) * scale
    attn = jax.nn.softmax(attn, axis=-1)
    out = jnp.einsum("bhnm,bhmd->bhnd", attn, v)
    out = out.transpose(0, 2, 1, 3).reshape(B, N, C)
    return jnp.einsum("bnc,oc->bno", out, wproj) + bproj


if __name__ == "__main__":
    # Small shapes consistent with the module: dim=C=32, num_heads=8, seq N=8.
    B, N, C = 2, 8, 32
    num_heads = 8

    key = jax.random.PRNGKey(0)
    kx, kqkv, kproj, kb = jax.random.split(key, 4)

    x = jax.random.normal(kx, (B, N, C), dtype=jnp.float32)
    # PyTorch Linear weight shapes: (out_features, in_features).
    wqkv = jax.random.normal(kqkv, (3 * C, C), dtype=jnp.float32) * 0.05
    wproj = jax.random.normal(kproj, (C, C), dtype=jnp.float32) * 0.05
    bproj = jax.random.normal(kb, (C,), dtype=jnp.float32) * 0.05

    ref = attention_reference(x, wqkv, wproj, bproj, num_heads=num_heads)

    # Full-precision MXU path: tight check against the f32 reference.
    out_f32 = attention_pallas(x, wqkv, wproj, bproj, num_heads=num_heads,
                               mxu_dtype=jnp.float32)
    out_f32 = jax.block_until_ready(out_f32)
    assert out_f32.shape == (B, N, C)
    assert jnp.allclose(out_f32, ref, rtol=2e-3, atol=2e-3), "f32 path mismatch"

    # Default bf16-MXU path (f32 softmax / accumulation): looser tolerance.
    out_bf16 = attention_pallas(x, wqkv, wproj, bproj, num_heads=num_heads,
                                mxu_dtype=jnp.bfloat16)
    out_bf16 = jax.block_until_ready(out_bf16)
    assert out_bf16.shape == (B, N, C)
    assert jnp.allclose(out_bf16, ref, rtol=2e-2, atol=2e-2), "bf16 path mismatch"

    print("KERNEL_OK")
</pallas_src>

<mosaic_0001>
module attributes {stable_mosaic.version = 11 : i64} {
  func.func @_attention_head_kernel(%arg0: i32, %arg1: i32, %arg2: memref<1x8x32xf32, #tpu.memory_space<vmem>>, %arg3: memref<1x32x4xf32, #tpu.memory_space<vmem>>, %arg4: memref<1x32x4xf32, #tpu.memory_space<vmem>>, %arg5: memref<1x32x4xf32, #tpu.memory_space<vmem>>, %arg6: memref<1x4x32xf32, #tpu.memory_space<vmem>>, %arg7: memref<1x32xf32, #tpu.memory_space<vmem>>, %arg8: memref<1x8x32xf32, #tpu.memory_space<vmem>>, %arg9: memref<8x32xf32, #tpu.memory_space<vmem>>) attributes {dimension_semantics = [#tpu.dimension_semantics<parallel>, #tpu.dimension_semantics<arbitrary>], iteration_bounds = array<i64: 2, 8>, scalar_prefetch = 0 : i64, scratch_operands = 1 : i64, tpu.core_type = #tpu.core_type<tc>, window_params = [{transform_indices = @transform_0, window_bounds = array<i64: 1, 8, 32>}, {transform_indices = @transform_1, window_bounds = array<i64: 1, 32, 4>}, {transform_indices = @transform_2, window_bounds = array<i64: 1, 32, 4>}, {transform_indices = @transform_3, window_bounds = array<i64: 1, 32, 4>}, {transform_indices = @transform_4, window_bounds = array<i64: 1, 4, 32>}, {pipeline_mode = #tpu.pipeline_mode<synchronous>, transform_indices = @transform_5, window_bounds = array<i64: 1, 32>}, {transform_indices = @transform_6, window_bounds = array<i64: 1, 8, 32>}]} {
    %c0 = arith.constant 0 : index
    %c0_0 = arith.constant 0 : index
    %c0_1 = arith.constant 0 : index
    %0 = vector.load %arg2[%c0, %c0_0, %c0_1] : memref<1x8x32xf32, #tpu.memory_space<vmem>>, vector<1x8x32xf32>
    %1 = vector.shape_cast %0 : vector<1x8x32xf32> to vector<8x32xf32>
    %c0_2 = arith.constant 0 : index
    %c0_3 = arith.constant 0 : index
    %c0_4 = arith.constant 0 : index
    %2 = vector.load %arg3[%c0_2, %c0_3, %c0_4] : memref<1x32x4xf32, #tpu.memory_space<vmem>>, vector<1x32x4xf32>
    %3 = vector.shape_cast %2 : vector<1x32x4xf32> to vector<32x4xf32>
    %cst = arith.constant dense<0.000000e+00> : vector<8x4xf32>
    %4 = tpu.matmul %1, %3, %cst {dimension_numbers = #tpu.dot_dimension_numbers<[1], [0], [0], [1], [0, 0, 1, 1], [], []>} : vector<8x32xf32>, vector<32x4xf32>, vector<8x4xf32> -> vector<8x4xf32>
    %c0_5 = arith.constant 0 : index
    %c0_6 = arith.constant 0 : index
    %c0_7 = arith.constant 0 : index
    %5 = vector.load %arg4[%c0_5, %c0_6, %c0_7] : memref<1x32x4xf32, #tpu.memory_space<vmem>>, vector<1x32x4xf32>
    %6 = vector.shape_cast %5 : vector<1x32x4xf32> to vector<32x4xf32>
    %cst_8 = arith.constant dense<0.000000e+00> : vector<8x4xf32>
    %7 = tpu.matmul %1, %6, %cst_8 {dimension_numbers = #tpu.dot_dimension_numbers<[1], [0], [0], [1], [0, 0, 1, 1], [], []>} : vector<8x32xf32>, vector<32x4xf32>, vector<8x4xf32> -> vector<8x4xf32>
    %c0_9 = arith.constant 0 : index
    %c0_10 = arith.constant 0 : index
    %c0_11 = arith.constant 0 : index
    %8 = vector.load %arg5[%c0_9, %c0_10, %c0_11] : memref<1x32x4xf32, #tpu.memory_space<vmem>>, vector<1x32x4xf32>
    %9 = vector.shape_cast %8 : vector<1x32x4xf32> to vector<32x4xf32>
    %cst_12 = arith.constant dense<0.000000e+00> : vector<8x4xf32>
    %10 = tpu.matmul %1, %9, %cst_12 {dimension_numbers = #tpu.dot_dimension_numbers<[1], [0], [0], [1], [0, 0, 1, 1], [], []>} : vector<8x32xf32>, vector<32x4xf32>, vector<8x4xf32> -> vector<8x4xf32>
    %cst_13 = arith.constant dense<0.000000e+00> : vector<8x8xf32>
    %11 = tpu.matmul %4, %7, %cst_13 {dimension_numbers = #tpu.dot_dimension_numbers<[1], [1], [0], [0], [0, 0, 1, 0], [], []>} : vector<8x4xf32>, vector<8x4xf32>, vector<8x8xf32> -> vector<8x8xf32>
    %cst_14 = arith.constant dense<0xFF800000> : vector<8xf32>
    %12 = vector.multi_reduction <maximumf>, %11, %cst_14 [1] : vector<8x8xf32> to vector<8xf32>
    %13 = vector.shape_cast %12 : vector<8xf32> to vector<8x1xf32>
    %14 = vector.broadcast %13 : vector<8x1xf32> to vector<8x8xf32>
    %15 = arith.subf %11, %14 : vector<8x8xf32>
    %16 = math.exp %15 : vector<8x8xf32>
    %cst_15 = arith.constant dense<0.000000e+00> : vector<8xf32>
    %17 = vector.multi_reduction <add>, %16, %cst_15 [1] : vector<8x8xf32> to vector<8xf32>
    %18 = vector.shape_cast %17 : vector<8xf32> to vector<8x1xf32>
    %19 = tpu.reciprocal %18 : vector<8x1xf32> -> vector<8x1xf32>
    %20 = vector.broadcast %19 : vector<8x1xf32> to vector<8x8xf32>
    %21 = arith.mulf %16, %20 : vector<8x8xf32>
    %cst_16 = arith.constant dense<0.000000e+00> : vector<8x4xf32>
    %22 = tpu.matmul %21, %10, %cst_16 {dimension_numbers = #tpu.dot_dimension_numbers<[1], [0], [0], [1], [0, 0, 1, 1], [], []>} : vector<8x8xf32>, vector<8x4xf32>, vector<8x4xf32> -> vector<8x4xf32>
    %c0_17 = arith.constant 0 : index
    %c0_18 = arith.constant 0 : index
    %c0_19 = arith.constant 0 : index
    %23 = vector.load %arg6[%c0_17, %c0_18, %c0_19] : memref<1x4x32xf32, #tpu.memory_space<vmem>>, vector<1x4x32xf32>
    %24 = vector.shape_cast %23 : vector<1x4x32xf32> to vector<4x32xf32>
    %cst_20 = arith.constant dense<0.000000e+00> : vector<8x32xf32>
    %25 = tpu.matmul %22, %24, %cst_20 {dimension_numbers = #tpu.dot_dimension_numbers<[1], [0], [0], [1], [0, 0, 1, 1], [], []>} : vector<8x4xf32>, vector<4x32xf32>, vector<8x32xf32> -> vector<8x32xf32>
    %c0_i32 = arith.constant 0 : i32
    %26 = arith.cmpi eq, %arg1, %c0_i32 : i32
    %27 = arith.extui %26 : i1 to i32
    %c0_i32_21 = arith.constant 0 : i32
    %28 = arith.cmpi ne, %27, %c0_i32_21 : i32
    scf.if %28 {
      %cst_27 = arith.constant 0.000000e+00 : f32
      %35 = vector.broadcast %cst_27 : f32 to vector<8x32xf32>
      %c0_28 = arith.constant 0 : index
      %c0_29 = arith.constant 0 : index
      %36 = vector.load %arg9[%c0_28, %c0_29] : memref<8x32xf32, #tpu.memory_space<vmem>>, vector<8x32xf32>
      tpu.vector_store %arg9[%c0_28, %c0_29], %35 {strides = array<i32>} : memref<8x32xf32, #tpu.memory_space<vmem>>, vector<8x32xf32>,
    } else {
    }
    %c0_22 = arith.constant 0 : index
    %c0_23 = arith.constant 0 : index
    %29 = vector.load %arg9[%c0_22, %c0_23] : memref<8x32xf32, #tpu.memory_space<vmem>>, vector<8x32xf32>
    %30 = arith.addf %29, %25 : vector<8x32xf32>
    %c0_24 = arith.constant 0 : index
    %c0_25 = arith.constant 0 : index
    %31 = vector.load %arg9[%c0_24, %c0_25] : memref<8x32xf32, #tpu.memory_space<vmem>>, vector<8x32xf32>
    tpu.vector_store %arg9[%c0_24, %c0_25], %30 {strides = array<i32>} : memref<8x32xf32, #tpu.memory_space<vmem>>, vector<8x32xf32>,
    %c7_i32 = arith.constant 7 : i32
    %32 = arith.cmpi eq, %arg1, %c7_i32 : i32
    %33 = arith.extui %32 : i1 to i32
    %c0_i32_26 = arith.constant 0 : i32
    %34 = arith.cmpi ne, %33, %c0_i32_26 : i32
    scf.if %34 {
      %c0_27 = arith.constant 0 : index
      %c0_28 = arith.constant 0 : index
      %35 = vector.load %arg9[%c0_27, %c0_28] : memref<8x32xf32, #tpu.memory_space<vmem>>, vector<8x32xf32>
      %c0_29 = arith.constant 0 : index
      %c0_30 = arith.constant 0 : index
      %36 = vector.load %arg7[%c0_29, %c0_30] : memref<1x32xf32, #tpu.memory_space<vmem>>, vector<1x32xf32>
      %37 = vector.broadcast %36 : vector<1x32xf32> to vector<8x32xf32>
      %38 = arith.addf %35, %37 : vector<8x32xf32>
      %c0_31 = arith.constant 0 : index
      %c0_32 = arith.constant 0 : index
      %c0_33 = arith.constant 0 : index
      %39 = vector.load %arg8[%c0_31, %c0_32, %c0_33] : memref<1x8x32xf32, #tpu.memory_space<vmem>>, vector<1x8x32xf32>
      %40 = vector.shape_cast %39 : vector<1x8x32xf32> to vector<8x32xf32>
      %41 = vector.shape_cast %38 : vector<8x32xf32> to vector<1x8x32xf32>
      tpu.vector_store %arg8[%c0_31, %c0_32, %c0_33], %41 {strides = array<i32>} : memref<1x8x32xf32, #tpu.memory_space<vmem>>, vector<1x8x32xf32>,
    } else {
    }
    return
  }
  func.func @transform_0(%arg0: i32, %arg1: i32) -> (i32, i32, i32) {
    %c0_i32 = arith.constant 0 : i32
    %c0_i32_0 = arith.constant 0 : i32
    %c0_i32_1 = arith.constant 0 : i32
    return %arg0, %c0_i32, %c0_i32_0 : i32, i32, i32
  }
  func.func @transform_1(%arg0: i32, %arg1: i32) -> (i32, i32, i32) {
    %c0_i32 = arith.constant 0 : i32
    %c0_i32_0 = arith.constant 0 : i32
    %c0_i32_1 = arith.constant 0 : i32
    return %arg1, %c0_i32, %c0_i32_0 : i32, i32, i32
  }
  func.func @transform_2(%arg0: i32, %arg1: i32) -> (i32, i32, i32) {
    %c0_i32 = arith.constant 0 : i32
    %c0_i32_0 = arith.constant 0 : i32
    %c0_i32_1 = arith.constant 0 : i32
    return %arg1, %c0_i32, %c0_i32_0 : i32, i32, i32
  }
  func.func @transform_3(%arg0: i32, %arg1: i32) -> (i32, i32, i32) {
    %c0_i32 = arith.constant 0 : i32
    %c0_i32_0 = arith.constant 0 : i32
    %c0_i32_1 = arith.constant 0 : i32
    return %arg1, %c0_i32, %c0_i32_0 : i32, i32, i32
  }
  func.func @transform_4(%arg0: i32, %arg1: i32) -> (i32, i32, i32) {
    %c0_i32 = arith.constant 0 : i32
    %c0_i32_0 = arith.constant 0 : i32
    %c0_i32_1 = arith.constant 0 : i32
    return %arg1, %c0_i32, %c0_i32_0 : i32, i32, i32
  }
  func.func @transform_5(%arg0: i32, %arg1: i32) -> (i32, i32) {
    %c0_i32 = arith.constant 0 : i32
    %c0_i32_0 = arith.constant 0 : i32
    %c0_i32_1 = arith.constant 0 : i32
    return %c0_i32, %c0_i32_0 : i32, i32
  }
  func.func @transform_6(%arg0: i32, %arg1: i32) -> (i32, i32, i32) {
    %c0_i32 = arith.constant 0 : i32
    %c0_i32_0 = arith.constant 0 : i32
    %c0_i32_1 = arith.constant 0 : i32
    return %arg0, %c0_i32, %c0_i32_0 : i32, i32, i32
  }
}

</mosaic_0001>

<llo_original>
// kernel: tpu_custom_call.1
$region0: #{tpu_custom_call.1}
  #allocation0 [shape = 'u32[]', space=smem, size = 0x4, offset = 0x4, fixed_abs, tag = 'smem constant byte address 0x4 - core index']
  #allocation1 [shape = 'u32[144,128]{1,0:T(1,128)}', space=vmem, size = 0x12000, scoped, tag = 'internal scratch']
  #allocation2 [shape = 'f32[8,32]{1,0:T(8,128)}', space=vmem, size = 0x1000, scoped, tag = 'scratch operand']
  %s0 = inlined_call_operand.vmem [shape: f32[2,8,32], index: 0, kind: input, shape index: {}]
  %s1 = inlined_call_operand.vmem [shape: f32[8,32,4], index: 1, kind: input, shape index: {}]
  %s2 = inlined_call_operand.vmem [shape: f32[8,32,4], index: 2, kind: input, shape index: {}]
  %s3 = inlined_call_operand.vmem [shape: f32[8,32,4], index: 3, kind: input, shape index: {}]
  %s4 = inlined_call_operand.vmem [shape: f32[8,4,32], index: 4, kind: input, shape index: {}]
  %s5 = inlined_call_operand.vmem [shape: f32[1,32], index: 5, kind: input, shape index: {}]
  %s6 = inlined_call_operand.hbm [shape: f32[2,8,32], index: 6, kind: output, shape index: {}]
  %s7 = sld [smem:[#allocation0]]
  $region65: #{tpu_custom_call.1} parent=0
    _
  %s9 = ssub.s32 1, %s7
  %s10 = scalar_select 0, %s9, %s7
  $region1: #{tpu_custom_call.1} parent=0
    #allocation3 [shape = 'u8[8192]{0}', space=vmem, size = 0x2000, scoped, tag = 'output window, operand 0']
    #allocation4 [shape = 's32[2]{0}', space=sflag, size = 0x8, scoped, tag = 'scoped memory for tpu_custom_call.1']
    %11 = vsyncpa [#allocation4], 0
    %s12 = scalar_lea.sflag [#allocation4], 1
    %13 = vsyncpa %s12, 0
    loop: start=0, step=1, limit=18
    $region2: #{tpu_custom_call.1} parent=1 // loop_pre_header
      _
    $region3: #{tpu_custom_call.1} parent=1 // loop_header
      %s15 = sphi 0, %s19
      %p16 = scmp.ge.s32.totalorder %s15, 18
      %s22 = sphi 0, %s34
      %s23 = sphi 0, %s30
      %s24 = sphi 0, %s22
      %s25 = sphi 0, %s23
      %s26 = sphi 0, %s24
      %s27 = sphi 0, %s25
      %s37 = sphi 0, %s39
      %s40 = sphi 0, %s37
      %s41 = sphi 0, %s40
      %s57 = sphi 0, %s41
      %s63 = sphi 0, %s65
      %s66 = sphi 0, %s63
      %s67 = sphi 0, %s66
      %s83 = sphi 0, %s67
      %s89 = sphi 0, %s91
      %s92 = sphi 0, %s89
      %s93 = sphi 0, %s92
      %s109 = sphi 0, %s93
      %s115 = sphi 0, %s117
      %s118 = sphi 0, %s115
      %s119 = sphi 0, %s118
      %s135 = sphi 0, %s119
      %s141 = sphi 0, %s143
      %s144 = sphi 0, %s141
      %s145 = sphi 0, %s144
      %s161 = sphi 0, %s145
      %s165 = sphi 0, %s165
      %s167 = sphi 0, %s165
      %s168 = sphi 0, %s167
      %s182 = sphi 0, %s168
      %s188 = sphi 0, %s190
      %s191 = sphi 0, %s188
      %s192 = sphi 0, %s191
      %s208 = sphi 0, %s192
    $region4: #{tpu_custom_call.1} parent=1 // loop_header_branch
      %18 = sbr.rel (%p16) target = $region8
    $region5: #{tpu_custom_call.1} parent=1 // loop_body
      %s20 = ssub.s32 %s15, 1
      %s21 = ssub.s32 %s15, 2
      %s28 = sadd.s32 1, %s23
      %p29 = scmp.ge.s32.totalorder %s28, 8
      %s30 = scalar_select %p29, 0, %s28
      %s31 = sadd.s32 1, %s22
      %s32 = scalar_select %p29, %s31, %s22
      %p33 = scmp.ge.s32.totalorder %s32, 2
      %s34 = scalar_select %p33, 0, %s32
      %s35 = ssub.s32 %s22, %s34
      %p36 = scmp.eq.s32.totalorder %s35, 0
      %s38 = sadd.s32 %s37, 1
      %s39 = scalar_select %p36, %s37, %s38
      %p42 = pneg %p36
      %p43 = scmp.eq.s32.totalorder %s15, 15
      %p44 = por %p42, %p43
      %p45 = scmp.ne.s32.totalorder %s37, %s40
      %p46 = scmp.eq.s32.totalorder %s15, 0
      %p47 = por %p45, %p46
      %p48 = scmp.ne.s32.totalorder %s37, %s40
      %p49 = scmp.eq.s32.totalorder %s20, 15
      %p50 = por %p48, %p49
      %p51 = scmp.ne.s32.totalorder %s40, %s41
      %p52 = scmp.eq.s32.totalorder %s20, 0
      %p53 = por %p51, %p52
      %p54 = scmp.ne.s32.totalorder %s40, %s41
      %p55 = scmp.eq.s32.totalorder %s21, 15
      %p56 = por %p54, %p55
      %p58 = scmp.ne.s32.totalorder %s41, %s57
      %p59 = scmp.eq.s32.totalorder %s21, 0
      %p60 = por %p58, %p59
      %s61 = ssub.s32 %s23, %s30
      %p62 = scmp.eq.s32.totalorder %s61, 0
      %s64 = sadd.s32 %s63, 1
      %s65 = scalar_select %p62, %s63, %s64
      %p68 = pneg %p62
      %p69 = scmp.eq.s32.totalorder %s15, 15
      %p70 = por %p68, %p69
      %p71 = scmp.ne.s32.totalorder %s63, %s66
      %p72 = scmp.eq.s32.totalorder %s15, 0
      %p73 = por %p71, %p72
      %p74 = scmp.ne.s32.totalorder %s63, %s66
      %p75 = scmp.eq.s32.totalorder %s20, 15
      %p76 = por %p74, %p75
      %p77 = scmp.ne.s32.totalorder %s66, %s67
      %p78 = scmp.eq.s32.totalorder %s20, 0
      %p79 = por %p77, %p78
      %p80 = scmp.ne.s32.totalorder %s66, %s67
      %p81 = scmp.eq.s32.totalorder %s21, 15
      %p82 = por %p80, %p81
      %p84 = scmp.ne.s32.totalorder %s67, %s83
      %p85 = scmp.eq.s32.totalorder %s21, 0
      %p86 = por %p84, %p85
      %s87 = ssub.s32 %s23, %s30
      %p88 = scmp.eq.s32.totalorder %s87, 0
      %s90 = sadd.s32 %s89, 1
      %s91 = scalar_select %p88, %s89, %s90
      %p94 = pneg %p88
      %p95 = scmp.eq.s32.totalorder %s15, 15
      %p96 = por %p94, %p95
      %p97 = scmp.ne.s32.totalorder %s89, %s92
      %p98 = scmp.eq.s32.totalorder %s15, 0
      %p99 = por %p97, %p98
      %p100 = scmp.ne.s32.totalorder %s89, %s92
      %p101 = scmp.eq.s32.totalorder %s20, 15
      %p102 = por %p100, %p101
      %p103 = scmp.ne.s32.totalorder %s92, %s93
      %p104 = scmp.eq.s32.totalorder %s20, 0
      %p105 = por %p103, %p104
      %p106 = scmp.ne.s32.totalorder %s92, %s93
      %p107 = scmp.eq.s32.totalorder %s21, 15
      %p108 = por %p106, %p107
      %p110 = scmp.ne.s32.totalorder %s93, %s109
      %p111 = scmp.eq.s32.totalorder %s21, 0
      %p112 = por %p110, %p111
      %s113 = ssub.s32 %s23, %s30
      %p114 = scmp.eq.s32.totalorder %s113, 0
      %s116 = sadd.s32 %s115, 1
      %s117 = scalar_select %p114, %s115, %s116
      %p120 = pneg %p114
      %p121 = scmp.eq.s32.totalorder %s15, 15
      %p122 = por %p120, %p121
      %p123 = scmp.ne.s32.totalorder %s115, %s118
      %p124 = scmp.eq.s32.totalorder %s15, 0
      %p125 = por %p123, %p124
      %p126 = scmp.ne.s32.totalorder %s115, %s118
      %p127 = scmp.eq.s32.totalorder %s20, 15
      %p128 = por %p126, %p127
      %p129 = scmp.ne.s32.totalorder %s118, %s119
      %p130 = scmp.eq.s32.totalorder %s20, 0
      %p131 = por %p129, %p130
      %p132 = scmp.ne.s32.totalorder %s118, %s119
      %p133 = scmp.eq.s32.totalorder %s21, 15
      %p134 = por %p132, %p133
      %p136 = scmp.ne.s32.totalorder %s119, %s135
      %p137 = scmp.eq.s32.totalorder %s21, 0
      %p138 = por %p136, %p137
      %s139 = ssub.s32 %s23, %s30
      %p140 = scmp.eq.s32.totalorder %s139, 0
      %s142 = sadd.s32 %s141, 1
      %s143 = scalar_select %p140, %s141, %s142
      %p146 = pneg %p140
      %p147 = scmp.eq.s32.totalorder %s15, 15
      %p148 = por %p146, %p147
      %p149 = scmp.ne.s32.totalorder %s141, %s144
      %p150 = scmp.eq.s32.totalorder %s15, 0
      %p151 = por %p149, %p150
      %p152 = scmp.ne.s32.totalorder %s141, %s144
      %p153 = scmp.eq.s32.totalorder %s20, 15
      %p154 = por %p152, %p153
      %p155 = scmp.ne.s32.totalorder %s144, %s145
      %p156 = scmp.eq.s32.totalorder %s20, 0
      %p157 = por %p155, %p156
      %p158 = scmp.ne.s32.totalorder %s144, %s145
      %p159 = scmp.eq.s32.totalorder %s21, 15
      %p160 = por %p158, %p159
      %p162 = scmp.ne.s32.totalorder %s145, %s161
      %p163 = scmp.eq.s32.totalorder %s21, 0
      %p164 = por %p162, %p163
      %s166 = sadd.s32 %s165, 1
      %p169 = scmp.eq.s32.totalorder %s15, 15
      %p170 = scmp.ne.s32.totalorder %s165, %s167
      %p171 = scmp.eq.s32.totalorder %s15, 0
      %p172 = por %p170, %p171
      %p173 = scmp.ne.s32.totalorder %s165, %s167
      %p174 = scmp.eq.s32.totalorder %s20, 15
      %p175 = por %p173, %p174
      %p176 = scmp.ne.s32.totalorder %s167, %s168
      %p177 = scmp.eq.s32.totalorder %s20, 0
      %p178 = por %p176, %p177
      %p179 = scmp.ne.s32.totalorder %s167, %s168
      %p180 = scmp.eq.s32.totalorder %s21, 15
      %p181 = por %p179, %p180
      %p183 = scmp.ne.s32.totalorder %s168, %s182
      %p184 = scmp.eq.s32.totalorder %s21, 0
      %p185 = por %p183, %p184
      %s186 = ssub.s32 %s22, %s34
      %p187 = scmp.eq.s32.totalorder %s186, 0
      %s189 = sadd.s32 %s188, 1
      %s190 = scalar_select %p187, %s188, %s189
      %p193 = pneg %p187
      %p194 = scmp.eq.s32.totalorder %s15, 15
      %p195 = por %p193, %p194
      %p196 = scmp.ne.s32.totalorder %s188, %s191
      %p197 = scmp.eq.s32.totalorder %s15, 0
      %p198 = por %p196, %p197
      %p199 = scmp.ne.s32.totalorder %s188, %s191
      %p200 = scmp.eq.s32.totalorder %s20, 15
      %p201 = por %p199, %p200
      %p202 = scmp.ne.s32.totalorder %s191, %s192
      %p203 = scmp.eq.s32.totalorder %s20, 0
      %p204 = por %p202, %p203
      %p205 = scmp.ne.s32.totalorder %s191, %s192
      %p206 = scmp.eq.s32.totalorder %s21, 15
      %p207 = por %p205, %p206
      %p209 = scmp.ne.s32.totalorder %s192, %s208
      %p210 = scmp.eq.s32.totalorder %s21, 0
      %p211 = por %p209, %p210
      %p212 = scmp.le.s32.totalorder 1, %s15
      %p213 = scmp.lt.s32.totalorder %s15, 17
      %p214 = pnand %p212, %p213
      %p215 = pneg %p214
      // Predicated region
      $region9: #{tpu_custom_call.1} parent=5 // pred_check
        _
      $region10: #{tpu_custom_call.1} parent=5 // pred_check_branch
        %217 = sbr.rel (%p214) target = $region12
      $region11: #{tpu_custom_call.1} parent=5 // pred_region
        %s218 = ssub.s32 %s15, 1
        // Predicated region
        $region13: #{tpu_custom_call.1} parent=11 // pred_check
          %p219 = pneg %p178
        $region14: #{tpu_custom_call.1} parent=11 // pred_check_branch
          %221 = sbr.rel (%p219) target = $region16
        $region15: #{tpu_custom_call.1} parent=11 // pred_region
          _
        $region16: #{tpu_custom_call.1} parent=11 // pred_fallthru
          _
      $region12: #{tpu_custom_call.1} parent=5 // pred_fallthru
        _
      %p222 = scmp.lt.s32.totalorder %s15, 16
      // Predicated region
      $region17: #{tpu_custom_call.1} parent=5 // pred_check
        %p223 = pneg %p222
      $region18: #{tpu_custom_call.1} parent=5 // pred_check_branch
        %225 = sbr.rel (%p223) target = $region20
      $region19: #{tpu_custom_call.1} parent=5 // pred_region
        // Predicated region
        $region21: #{tpu_custom_call.1} parent=19 // pred_check
          %p226 = pneg %p47
        $region22: #{tpu_custom_call.1} parent=19 // pred_check_branch
          %228 = sbr.rel (%p226) target = $region24
        $region23: #{tpu_custom_call.1} parent=19 // pred_region
          %p229 = scmp.lt.s32.totalorder %s22, 1
          %s230 = scalar_select %p229, %s22, 1
          %s231 = smul.addr %s230, 8
          %s232 = scalar_lea.vmem %s0, %s231
        $region24: #{tpu_custom_call.1} parent=19 // pred_fallthru
          _
        // Predicated region
        $region25: #{tpu_custom_call.1} parent=19 // pred_check
          %p233 = pneg %p73
        $region26: #{tpu_custom_call.1} parent=19 // pred_check_branch
          %235 = sbr.rel (%p233) target = $region28
        $region27: #{tpu_custom_call.1} parent=19 // pred_region
          %p236 = scmp.lt.s32.totalorder %s23, 7
          %s237 = scalar_select %p236, %s23, 7
          %s238 = smul.addr %s237, 4
          %s239 = smul.addr %s238, 8
          %s240 = scalar_lea.vmem %s1, %s239
        $region28: #{tpu_custom_call.1} parent=19 // pred_fallthru
          _
        // Predicated region
        $region29: #{tpu_custom_call.1} parent=19 // pred_check
          %p241 = pneg %p99
        $region30: #{tpu_custom_call.1} parent=19 // pred_check_branch
          %243 = sbr.rel (%p241) target = $region32
        $region31: #{tpu_custom_call.1} parent=19 // pred_region
          %p244 = scmp.lt.s32.totalorder %s23, 7
          %s245 = scalar_select %p244, %s23, 7
          %s246 = smul.addr %s245, 4
          %s247 = smul.addr %s246, 8
          %s248 = scalar_lea.vmem %s2, %s247
        $region32: #{tpu_custom_call.1} parent=19 // pred_fallthru
          _
        // Predicated region
        $region33: #{tpu_custom_call.1} parent=19 // pred_check
          %p249 = pneg %p125
        $region34: #{tpu_custom_call.1} parent=19 // pred_check_branch
          %251 = sbr.rel (%p249) target = $region36
        $region35: #{tpu_custom_call.1} parent=19 // pred_region
          %p252 = scmp.lt.s32.totalorder %s23, 7
          %s253 = scalar_select %p252, %s23, 7
          %s254 = smul.addr %s253, 4
          %s255 = smul.addr %s254, 8
          %s256 = scalar_lea.vmem %s3, %s255
        $region36: #{tpu_custom_call.1} parent=19 // pred_fallthru
          _
        // Predicated region
        $region37: #{tpu_custom_call.1} parent=19 // pred_check
          %p257 = pneg %p151
        $region38: #{tpu_custom_call.1} parent=19 // pred_check_branch
          %259 = sbr.rel (%p257) target = $region40
        $region39: #{tpu_custom_call.1} parent=19 // pred_region
          %p260 = scmp.lt.s32.totalorder %s23, 7
          %s261 = scalar_select %p260, %s23, 7
          %s262 = smul.addr %s261, 4
          %s263 = scalar_lea.vmem %s4, %s262
        $region40: #{tpu_custom_call.1} parent=19 // pred_fallthru
          _
      $region20: #{tpu_custom_call.1} parent=5 // pred_fallthru
        _
      %p264 = scmp.le.s32.totalorder 1, %s15
      %p265 = scmp.lt.s32.totalorder %s15, 17
      %p266 = pnand %p264, %p265
      %p267 = pneg %p266
      // Predicated region
      $region41: #{tpu_custom_call.1} parent=5 // pred_check
        _
      $region42: #{tpu_custom_call.1} parent=5 // pred_check_branch
        %269 = sbr.rel (%p266) target = $region44
      $region43: #{tpu_custom_call.1} parent=5 // pred_region
        %s270 = ssub.s32 %s15, 1
        %p271 = scmp.lt.s32.totalorder %s24, 1
        %s272 = scalar_select %p271, %s24, 1
        %s273 = smul.addr %s272, 8
        %s274 = scalar_lea.vmem %s0, %s273
        %p275 = pneg %p53
        %p276 = pneg %p50
        %p277 = scmp.lt.s32.totalorder %s25, 7
        %s278 = scalar_select %p277, %s25, 7
        %s279 = smul.addr %s278, 4
        %s280 = smul.addr %s279, 8
        %s281 = scalar_lea.vmem %s1, %s280
        %p282 = pneg %p79
        %p283 = pneg %p76
        %p284 = scmp.lt.s32.totalorder %s25, 7
        %s285 = scalar_select %p284, %s25, 7
        %s286 = smul.addr %s285, 4
        %s287 = smul.addr %s286, 8
        %s288 = scalar_lea.vmem %s2, %s287
        %p289 = pneg %p105
        %p290 = pneg %p102
        %p291 = scmp.lt.s32.totalorder %s25, 7
        %s292 = scalar_select %p291, %s25, 7
        %s293 = smul.addr %s292, 4
        %s294 = smul.addr %s293, 8
        %s295 = scalar_lea.vmem %s3, %s294
        %p296 = pneg %p131
        %p297 = pneg %p128
        %p298 = scmp.lt.s32.totalorder %s25, 7
        %s299 = scalar_select %p298, %s25, 7
        %s300 = smul.addr %s299, 4
        %s301 = scalar_lea.vmem %s4, %s300
        %p302 = pneg %p157
        %p303 = pneg %p154
        %p304 = pneg %p178
        %p305 = pneg %p175
        %p306 = pneg %p204
        %p307 = pneg %p201
        %s308 = sand.u32 %s191, 1
        %s309 = scalar_lea.sflag [#allocation4], %s308
        %s310 = sand.u32 %s191, 1
        %s311 = smul.addr %s310, 8
        %s312 = scalar_lea.vmem [#allocation3], %s311
        %p313 = scmp.lt.s32.totalorder %s24, 1
        %s314 = scalar_select %p313, %s24, 1
        %s315 = smul.addr %s314, 8
        %s316 = scalar_lea.vmem %s0, %s315
        %p317 = scmp.lt.s32.totalorder %s25, 7
        %s318 = scalar_select %p317, %s25, 7
        %s319 = smul.addr %s318, 4
        %s320 = smul.addr %s319, 8
        %s321 = scalar_lea.vmem %s1, %s320
        %p322 = scmp.lt.s32.totalorder %s25, 7
        %s323 = scalar_select %p322, %s25, 7
        %s324 = smul.addr %s323, 4
        %s325 = smul.addr %s324, 8
        %s326 = scalar_lea.vmem %s2, %s325
        %p327 = scmp.lt.s32.totalorder %s25, 7
        %s328 = scalar_select %p327, %s25, 7
        %s329 = smul.addr %s328, 4
        %s330 = smul.addr %s329, 8
        %s331 = scalar_lea.vmem %s3, %s330
        %p332 = scmp.lt.s32.totalorder %s25, 7
        %s333 = scalar_select %p332, %s25, 7
        %s334 = smul.addr %s333, 4
        %s335 = scalar_lea.vmem %s4, %s334
        %v336 = vld [vmem:[%s316] sm:$0xff]
        %v337 = vld [vmem:[%s321] sm:$0xff]
        %v338 = vld [vmem:[%s321 + $0x8] sm:$0xff]
        %v339 = vld [vmem:[%s321 + $0x10] sm:$0xff]
        %v340 = vld [vmem:[%s321 + $0x18] sm:$0xff]
        %vm341 = vcmask 261120
        %v343 = vsel %vm341, %v336, 0
        %345 = vmatprep.subr.mxu0 0.0
        %346 = vmatpush1.msra.mxu0 %v337
        %347 = vmatprep.subr.mxu0 0.0
        %348 = vmatpush1.msra.mxu0 %v338
        %349 = vmatprep.subr.mxu0 0.0
        %350 = vmatpush1.msra.mxu0 %v339
        %351 = vmatprep.subr.mxu0 0.0
        %352 = vmatpush1.msra.mxu0 %v340
        %353 = vmatprep.subr.mxu0 0.0
        %354 = vmatpush1.msra.mxu0 0.0
        %355 = vmatprep.subr.mxu0 0.0
        %356 = vmatpush1.msra.mxu0 0.0
        %357 = vmatprep.subr.mxu0 0.0
        %358 = vmatpush1.msra.mxu0 0.0
        %359 = vmatprep.subr.mxu0 0.0
        %360 = vmatpush1.msra.mxu0 0.0
        %361 = vmatprep.subr.mxu0 0.0
        %362 = vmatpush1.msra.mxu0 0.0
        %363 = vmatprep.subr.mxu0 0.0
        %364 = vmatpush1.msra.mxu0 0.0
        %365 = vmatprep.subr.mxu0 0.0
        %366 = vmatpush1.msra.mxu0 0.0
        %367 = vmatprep.subr.mxu0 0.0
        %368 = vmatpush1.msra.mxu0 0.0
        %369 = vmatprep.subr.mxu0 0.0
        %370 = vmatpush1.msra.mxu0 0.0
        %371 = vmatprep.subr.mxu0 0.0
        %372 = vmatpush1.msra.mxu0 0.0
        %373 = vmatprep.subr.mxu0 0.0
        %374 = vmatpush1.msra.mxu0 0.0
        %375 = vmatprep.subr.mxu0 0.0
        %376 = vmatpush1.msra.mxu0 0.0
        %377 = vmatprep.subr.mxu0 0.0
        %378 = vmatpush1.msra.mxu0 0.0
        %379 = vmatprep.subr.mxu0 0.0
        %380 = vmatpush1.msra.mxu0 0.0
        %381 = vmatprep.subr.mxu0 0.0
        %382 = vmatpush1.msra.mxu0 0.0
        %383 = vmatprep.subr.mxu0 0.0
        %384 = vmatpush1.msra.mxu0 0.0
        %385 = vmatprep.subr.mxu0 0.0
        %386 = vmatpush1.msra.mxu0 0.0
        %387 = vmatprep.subr.mxu0 0.0
        %388 = vmatpush1.msra.mxu0 0.0
        %389 = vmatprep.subr.mxu0 0.0
        %390 = vmatpush1.msra.mxu0 0.0
        %391 = vmatprep.subr.mxu0 0.0
        %392 = vmatpush1.msra.mxu0 0.0
        %393 = vmatprep.subr.mxu0 0.0
        %394 = vmatpush1.msra.mxu0 0.0
        %395 = vmatprep.subr.mxu0 0.0
        %396 = vmatpush1.msra.mxu0 0.0
        %397 = vmatprep.subr.mxu0 0.0
        %398 = vmatpush1.msra.mxu0 0.0
        %399 = vmatprep.subr.mxu0 0.0
        %400 = vmatpush1.msra.mxu0 0.0
        %401 = vmatprep.subr.mxu0 0.0
        %402 = vmatpush1.msra.mxu0 0.0
        %403 = vmatprep.subr.mxu0 0.0
        %404 = vmatpush1.msra.mxu0 0.0
        %405 = vmatprep.subr.mxu0 0.0
        %406 = vmatpush1.msra.mxu0 0.0
        %407 = vmatprep.subr.mxu0 0.0
        %408 = vmatpush1.msra.mxu0 0.0
        %409 = vmatprep.mubr.f32.mxu0 0.0
        %410 = vmatmul.mubr.f32.gmra.mrb[0].mxu0 %v343
        %v411 = vpop.f32.mrb[0].mxu0
        %v412 = vadd.f32 0.0, %v411
        %v413 = vpop.f32.mrb[0].mxu0
        %414 = vdwg.mxu0
        %v415 = vld [vmem:[%s326] sm:$0xff]
        %v416 = vld [vmem:[%s326 + $0x8] sm:$0xff]
        %v417 = vld [vmem:[%s326 + $0x10] sm:$0xff]
        %v418 = vld [vmem:[%s326 + $0x18] sm:$0xff]
        %419 = vmatprep.subr.mxu0 0.0
        %420 = vmatpush1.msra.mxu0 %v415
        %421 = vmatprep.subr.mxu0 0.0
        %422 = vmatpush1.msra.mxu0 %v416
        %423 = vmatprep.subr.mxu0 0.0
        %424 = vmatpush1.msra.mxu0 %v417
        %425 = vmatprep.subr.mxu0 0.0
        %426 = vmatpush1.msra.mxu0 %v418
        %427 = vmatprep.subr.mxu0 0.0
        %428 = vmatpush1.msra.mxu0 0.0
        %429 = vmatprep.subr.mxu0 0.0
        %430 = vmatpush1.msra.mxu0 0.0
        %431 = vmatprep.subr.mxu0 0.0
        %432 = vmatpush1.msra.mxu0 0.0
        %433 = vmatprep.subr.mxu0 0.0
        %434 = vmatpush1.msra.mxu0 0.0
        %435 = vmatprep.subr.mxu0 0.0
        %436 = vmatpush1.msra.mxu0 0.0
        %437 = vmatprep.subr.mxu0 0.0
        %438 = vmatpush1.msra.mxu0 0.0
        %439 = vmatprep.subr.mxu0 0.0
        %440 = vmatpush1.msra.mxu0 0.0
        %441 = vmatprep.subr.mxu0 0.0
        %442 = vmatpush1.msra.mxu0 0.0
        %443 = vmatprep.subr.mxu0 0.0
        %444 = vmatpush1.msra.mxu0 0.0
        %445 = vmatprep.subr.mxu0 0.0
        %446 = vmatpush1.msra.mxu0 0.0
        %447 = vmatprep.subr.mxu0 0.0
        %448 = vmatpush1.msra.mxu0 0.0
        %449 = vmatprep.subr.mxu0 0.0
        %450 = vmatpush1.msra.mxu0 0.0
        %451 = vmatprep.subr.mxu0 0.0
        %452 = vmatpush1.msra.mxu0 0.0
        %453 = vmatprep.subr.mxu0 0.0
        %454 = vmatpush1.msra.mxu0 0.0
        %455 = vmatprep.subr.mxu0 0.0
        %456 = vmatpush1.msra.mxu0 0.0
        %457 = vmatprep.subr.mxu0 0.0
        %458 = vmatpush1.msra.mxu0 0.0
        %459 = vmatprep.subr.mxu0 0.0
        %460 = vmatpush1.msra.mxu0 0.0
        %461 = vmatprep.subr.mxu0 0.0
        %462 = vmatpush1.msra.mxu0 0.0
        %463 = vmatprep.subr.mxu0 0.0
        %464 = vmatpush1.msra.mxu0 0.0
        %465 = vmatprep.subr.mxu0 0.0
        %466 = vmatpush1.msra.mxu0 0.0
        %467 = vmatprep.subr.mxu0 0.0
        %468 = vmatpush1.msra.mxu0 0.0
        %469 = vmatprep.subr.mxu0 0.0
        %470 = vmatpush1.msra.mxu0 0.0
        %471 = vmatprep.subr.mxu0 0.0
        %472 = vmatpush1.msra.mxu0 0.0
        %473 = vmatprep.subr.mxu0 0.0
        %474 = vmatpush1.msra.mxu0 0.0
        %475 = vmatprep.subr.mxu0 0.0
        %476 = vmatpush1.msra.mxu0 0.0
        %477 = vmatprep.subr.mxu0 0.0
        %478 = vmatpush1.msra.mxu0 0.0
        %479 = vmatprep.subr.mxu0 0.0
        %480 = vmatpush1.msra.mxu0 0.0
        %481 = vmatprep.subr.mxu0 0.0
        %482 = vmatpush1.msra.mxu0 0.0
        %483 = vmatprep.mubr.f32.mxu0 0.0
        %484 = vmatmul.mubr.f32.gmra.mrb[0].mxu0 %v343
        %v485 = vpop.f32.mrb[0].mxu0
        %v486 = vadd.f32 0.0, %v485
        %v487 = vpop.f32.mrb[0].mxu0
        %488 = vdwg.mxu0
        %v489 = vld [vmem:[%s331] sm:$0xff]
        %v490 = vld [vmem:[%s331 + $0x8] sm:$0xff]
        %v491 = vld [vmem:[%s331 + $0x10] sm:$0xff]
        %v492 = vld [vmem:[%s331 + $0x18] sm:$0xff]
        %493 = vmatprep.subr.mxu0 0.0
        %494 = vmatpush1.msra.mxu0 %v489
        %495 = vmatprep.subr.mxu0 0.0
        %496 = vmatpush1.msra.mxu0 %v490
        %497 = vmatprep.subr.mxu0 0.0
        %498 = vmatpush1.msra.mxu0 %v491
        %499 = vmatprep.subr.mxu0 0.0
        %500 = vmatpush1.msra.mxu0 %v492
        %501 = vmatprep.subr.mxu0 0.0
        %502 = vmatpush1.msra.mxu0 0.0
        %503 = vmatprep.subr.mxu0 0.0
        %504 = vmatpush1.msra.mxu0 0.0
        %505 = vmatprep.subr.mxu0 0.0
        %506 = vmatpush1.msra.mxu0 0.0
        %507 = vmatprep.subr.mxu0 0.0
        %508 = vmatpush1.msra.mxu0 0.0
        %509 = vmatprep.subr.mxu0 0.0
        %510 = vmatpush1.msra.mxu0 0.0
        %511 = vmatprep.subr.mxu0 0.0
        %512 = vmatpush1.msra.mxu0 0.0
        %513 = vmatprep.subr.mxu0 0.0
        %514 = vmatpush1.msra.mxu0 0.0
        %515 = vmatprep.subr.mxu0 0.0
        %516 = vmatpush1.msra.mxu0 0.0
        %517 = vmatprep.subr.mxu0 0.0
        %518 = vmatpush1.msra.mxu0 0.0
        %519 = vmatprep.subr.mxu0 0.0
        %520 = vmatpush1.msra.mxu0 0.0
        %521 = vmatprep.subr.mxu0 0.0
        %522 = vmatpush1.msra.mxu0 0.0
        %523 = vmatprep.subr.mxu0 0.0
        %524 = vmatpush1.msra.mxu0 0.0
        %525 = vmatprep.subr.mxu0 0.0
        %526 = vmatpush1.msra.mxu0 0.0
        %527 = vmatprep.subr.mxu0 0.0
        %528 = vmatpush1.msra.mxu0 0.0
        %529 = vmatprep.subr.mxu0 0.0
        %530 = vmatpush1.msra.mxu0 0.0
        %531 = vmatprep.subr.mxu0 0.0
        %532 = vmatpush1.msra.mxu0 0.0
        %533 = vmatprep.subr.mxu0 0.0
        %534 = vmatpush1.msra.mxu0 0.0
        %535 = vmatprep.subr.mxu0 0.0
        %536 = vmatpush1.msra.mxu0 0.0
        %537 = vmatprep.subr.mxu0 0.0
        %538 = vmatpush1.msra.mxu0 0.0
        %539 = vmatprep.subr.mxu0 0.0
        %540 = vmatpush1.msra.mxu0 0.0
        %541 = vmatprep.subr.mxu0 0.0
        %542 = vmatpush1.msra.mxu0 0.0
        %543 = vmatprep.subr.mxu0 0.0
        %544 = vmatpush1.msra.mxu0 0.0
        %545 = vmatprep.subr.mxu0 0.0
        %546 = vmatpush1.msra.mxu0 0.0
        %547 = vmatprep.subr.mxu0 0.0
        %548 = vmatpush1.msra.mxu0 0.0
        %549 = vmatprep.subr.mxu0 0.0
        %550 = vmatpush1.msra.mxu0 0.0
        %551 = vmatprep.subr.mxu0 0.0
        %552 = vmatpush1.msra.mxu0 0.0
        %553 = vmatprep.subr.mxu0 0.0
        %554 = vmatpush1.msra.mxu0 0.0
        %555 = vmatprep.subr.mxu0 0.0
        %556 = vmatpush1.msra.mxu0 0.0
        %557 = vmatprep.mubr.f32.mxu0 0.0
        %558 = vmatmul.mubr.f32.gmra.mrb[0].mxu0 %v343
        %v559 = vpop.f32.mrb[0].mxu0
        %v560 = vadd.f32 0.0, %v559
        %v561 = vpop.f32.mrb[0].mxu0
        %562 = vdwg.mxu0
        %vm563 = vcmask 31744
        %v565 = vsel %vm563, %v412, 0
        %v568 = vsel %vm563, %v486, 0
        %570 = vmatprep.subr.mxu0 0.0
        %571 = vmatpush1.xpose.msra.mxu0 %v568
        %572 = vmatprep.subr.mxu0 0.0
        %573 = vmatpush1.xpose.msra.mxu0 0.0
        %574 = vmatprep.subr.mxu0 0.0
        %575 = vmatpush1.xpose.msra.mxu0 0.0
        %576 = vmatprep.subr.mxu0 0.0
        %577 = vmatpush1.xpose.msra.mxu0 0.0
        %578 = vmatprep.subr.mxu0 0.0
        %579 = vmatpush1.xpose.msra.mxu0 0.0
        %580 = vmatprep.subr.mxu0 0.0
        %581 = vmatpush1.xpose.msra.mxu0 0.0
        %582 = vmatprep.subr.mxu0 0.0
        %583 = vmatpush1.xpose.msra.mxu0 0.0
        %584 = vmatprep.subr.mxu0 0.0
        %585 = vmatpush1.xpose.msra.mxu0 0.0
        %586 = vmatprep.subr.mxu0 0.0
        %587 = vmatpush1.xpose.msra.mxu0 0.0
        %588 = vmatprep.subr.mxu0 0.0
        %589 = vmatpush1.xpose.msra.mxu0 0.0
        %590 = vmatprep.subr.mxu0 0.0
        %591 = vmatpush1.xpose.msra.mxu0 0.0
        %592 = vmatprep.subr.mxu0 0.0
        %593 = vmatpush1.xpose.msra.mxu0 0.0
        %594 = vmatprep.subr.mxu0 0.0
        %595 = vmatpush1.xpose.msra.mxu0 0.0
        %596 = vmatprep.subr.mxu0 0.0
        %597 = vmatpush1.xpose.msra.mxu0 0.0
        %598 = vmatprep.subr.mxu0 0.0
        %599 = vmatpush1.xpose.msra.mxu0 0.0
        %600 = vmatprep.subr.mxu0 0.0
        %601 = vmatpush1.xpose.msra.mxu0 0.0
        %602 = vmatprep.subr.mxu0 0.0
        %603 = vmatpush1.xpose.msra.mxu0 0.0
        %604 = vmatprep.subr.mxu0 0.0
        %605 = vmatpush1.xpose.msra.mxu0 0.0
        %606 = vmatprep.subr.mxu0 0.0
        %607 = vmatpush1.xpose.msra.mxu0 0.0
        %608 = vmatprep.subr.mxu0 0.0
        %609 = vmatpush1.xpose.msra.mxu0 0.0
        %610 = vmatprep.subr.mxu0 0.0
        %611 = vmatpush1.xpose.msra.mxu0 0.0
        %612 = vmatprep.subr.mxu0 0.0
        %613 = vmatpush1.xpose.msra.mxu0 0.0
        %614 = vmatprep.subr.mxu0 0.0
        %615 = vmatpush1.xpose.msra.mxu0 0.0
        %616 = vmatprep.subr.mxu0 0.0
        %617 = vmatpush1.xpose.msra.mxu0 0.0
        %618 = vmatprep.subr.mxu0 0.0
        %619 = vmatpush1.xpose.msra.mxu0 0.0
        %620 = vmatprep.subr.mxu0 0.0
        %621 = vmatpush1.xpose.msra.mxu0 0.0
        %622 = vmatprep.subr.mxu0 0.0
        %623 = vmatpush1.xpose.msra.mxu0 0.0
        %624 = vmatprep.subr.mxu0 0.0
        %625 = vmatpush1.xpose.msra.mxu0 0.0
        %626 = vmatprep.subr.mxu0 0.0
        %627 = vmatpush1.xpose.msra.mxu0 0.0
        %628 = vmatprep.subr.mxu0 0.0
        %629 = vmatpush1.xpose.msra.mxu0 0.0
        %630 = vmatprep.subr.mxu0 0.0
        %631 = vmatpush1.xpose.msra.mxu0 0.0
        %632 = vmatprep.subr.mxu0 0.0
        %633 = vmatpush1.xpose.msra.mxu0 0.0
        %634 = vmatprep.mubr.f32.mxu0 0.0
        %635 = vmatmul.mubr.f32.gmra.mrb[0].mxu0 %v565
        %v636 = vpop.f32.mrb[0].mxu0
        %v637 = vadd.f32 0.0, %v636
        %v638 = vpop.f32.mrb[0].mxu0
        %639 = vdwg.mxu0
        %vm640 = vcmask 64512
        %v641 = vsel %vm640, %v637, -inf
        %642 = vmax.xlane.f32.xlu0 %v641
        %v643 = vpop.xlane.xlu0 %642
        %v644 = vsub.f32 %v637, %v643
        %v645 = vmul.f32 %v644, 1.442695
        %v646 = vpow.pop %v645
        %v647 = vsel %vm640, %v646, 0.0
        %648 = vadd.xlane.f32.xlu0 %v647
        %v649 = vpop.xlane.xlu0 %648
        %v650 = vrcp.pop %v649
        %v651 = vmul.f32 %v646, %v650
        %v653 = vsel %vm640, %v651, 0
        %655 = vmatprep.subr.mxu0 0.0
        %656 = vmatpush1.msra.mxu0 %v560
        %657 = vmatprep.subr.mxu0 0.0
        %658 = vmatpush1.msra.mxu0 0.0
        %659 = vmatprep.subr.mxu0 0.0
        %660 = vmatpush1.msra.mxu0 0.0
        %661 = vmatprep.subr.mxu0 0.0
        %662 = vmatpush1.msra.mxu0 0.0
        %663 = vmatprep.subr.mxu0 0.0
        %664 = vmatpush1.msra.mxu0 0.0
        %665 = vmatprep.subr.mxu0 0.0
        %666 = vmatpush1.msra.mxu0 0.0
        %667 = vmatprep.subr.mxu0 0.0
        %668 = vmatpush1.msra.mxu0 0.0
        %669 = vmatprep.subr.mxu0 0.0
        %670 = vmatpush1.msra.mxu0 0.0
        %671 = vmatprep.subr.mxu0 0.0
        %672 = vmatpush1.msra.mxu0 0.0
        %673 = vmatprep.subr.mxu0 0.0
        %674 = vmatpush1.msra.mxu0 0.0
        %675 = vmatprep.subr.mxu0 0.0
        %676 = vmatpush1.msra.mxu0 0.0
        %677 = vmatprep.subr.mxu0 0.0
        %678 = vmatpush1.msra.mxu0 0.0
        %679 = vmatprep.subr.mxu0 0.0
        %680 = vmatpush1.msra.mxu0 0.0
        %681 = vmatprep.subr.mxu0 0.0
        %682 = vmatpush1.msra.mxu0 0.0
        %683 = vmatprep.subr.mxu0 0.0
        %684 = vmatpush1.msra.mxu0 0.0
        %685 = vmatprep.subr.mxu0 0.0
        %686 = vmatpush1.msra.mxu0 0.0
        %687 = vmatprep.subr.mxu0 0.0
        %688 = vmatpush1.msra.mxu0 0.0
        %689 = vmatprep.subr.mxu0 0.0
        %690 = vmatpush1.msra.mxu0 0.0
        %691 = vmatprep.subr.mxu0 0.0
        %692 = vmatpush1.msra.mxu0 0.0
        %693 = vmatprep.subr.mxu0 0.0
        %694 = vmatpush1.msra.mxu0 0.0
        %695 = vmatprep.subr.mxu0 0.0
        %696 = vmatpush1.msra.mxu0 0.0
        %697 = vmatprep.subr.mxu0 0.0
        %698 = vmatpush1.msra.mxu0 0.0
        %699 = vmatprep.subr.mxu0 0.0
        %700 = vmatpush1.msra.mxu0 0.0
        %701 = vmatprep.subr.mxu0 0.0
        %702 = vmatpush1.msra.mxu0 0.0
        %703 = vmatprep.subr.mxu0 0.0
        %704 = vmatpush1.msra.mxu0 0.0
        %705 = vmatprep.subr.mxu0 0.0
        %706 = vmatpush1.msra.mxu0 0.0
        %707 = vmatprep.subr.mxu0 0.0
        %708 = vmatpush1.msra.mxu0 0.0
        %709 = vmatprep.subr.mxu0 0.0
        %710 = vmatpush1.msra.mxu0 0.0
        %711 = vmatprep.subr.mxu0 0.0
        %712 = vmatpush1.msra.mxu0 0.0
        %713 = vmatprep.subr.mxu0 0.0
        %714 = vmatpush1.msra.mxu0 0.0
        %715 = vmatprep.subr.mxu0 0.0
        %716 = vmatpush1.msra.mxu0 0.0
        %717 = vmatprep.subr.mxu0 0.0
        %718 = vmatpush1.msra.mxu0 0.0
        %719 = vmatprep.mubr.f32.mxu0 0.0
        %720 = vmatmul.mubr.f32.gmra.mrb[0].mxu0 %v653
        %v721 = vpop.f32.mrb[0].mxu0
        %v722 = vadd.f32 0.0, %v721
        %v723 = vpop.f32.mrb[0].mxu0
        %724 = vdwg.mxu0
        %v725 = vld [vmem:[%s335] sm:$0xf]
        %v727 = vsel %vm563, %v722, 0
        %vm729 = vcmask 1043456
        %v731 = vsel %vm729, %v725, 0
        %733 = vmatprep.subr.mxu0 0.0
        %734 = vmatpush1.msra.mxu0 %v731
        %735 = vmatprep.subr.mxu0 0.0
        %736 = vmatpush1.msra.mxu0 0.0
        %737 = vmatprep.subr.mxu0 0.0
        %738 = vmatpush1.msra.mxu0 0.0
        %739 = vmatprep.subr.mxu0 0.0
        %740 = vmatpush1.msra.mxu0 0.0
        %741 = vmatprep.subr.mxu0 0.0
        %742 = vmatpush1.msra.mxu0 0.0
        %743 = vmatprep.subr.mxu0 0.0
        %744 = vmatpush1.msra.mxu0 0.0
        %745 = vmatprep.subr.mxu0 0.0
        %746 = vmatpush1.msra.mxu0 0.0
        %747 = vmatprep.subr.mxu0 0.0
        %748 = vmatpush1.msra.mxu0 0.0
        %749 = vmatprep.subr.mxu0 0.0
        %750 = vmatpush1.msra.mxu0 0.0
        %751 = vmatprep.subr.mxu0 0.0
        %752 = vmatpush1.msra.mxu0 0.0
        %753 = vmatprep.subr.mxu0 0.0
        %754 = vmatpush1.msra.mxu0 0.0
        %755 = vmatprep.subr.mxu0 0.0
        %756 = vmatpush1.msra.mxu0 0.0
        %757 = vmatprep.subr.mxu0 0.0
        %758 = vmatpush1.msra.mxu0 0.0
        %759 = vmatprep.subr.mxu0 0.0
        %760 = vmatpush1.msra.mxu0 0.0
        %761 = vmatprep.subr.mxu0 0.0
        %762 = vmatpush1.msra.mxu0 0.0
        %763 = vmatprep.subr.mxu0 0.0
        %764 = vmatpush1.msra.mxu0 0.0
        %765 = vmatprep.subr.mxu0 0.0
        %766 = vmatpush1.msra.mxu0 0.0
        %767 = vmatprep.subr.mxu0 0.0
        %768 = vmatpush1.msra.mxu0 0.0
        %769 = vmatprep.subr.mxu0 0.0
        %770 = vmatpush1.msra.mxu0 0.0
        %771 = vmatprep.subr.mxu0 0.0
        %772 = vmatpush1.msra.mxu0 0.0
        %773 = vmatprep.subr.mxu0 0.0
        %774 = vmatpush1.msra.mxu0 0.0
        %775 = vmatprep.subr.mxu0 0.0
        %776 = vmatpush1.msra.mxu0 0.0
        %777 = vmatprep.subr.mxu0 0.0
        %778 = vmatpush1.msra.mxu0 0.0
        %779 = vmatprep.subr.mxu0 0.0
        %780 = vmatpush1.msra.mxu0 0.0
        %781 = vmatprep.subr.mxu0 0.0
        %782 = vmatpush1.msra.mxu0 0.0
        %783 = vmatprep.subr.mxu0 0.0
        %784 = vmatpush1.msra.mxu0 0.0
        %785 = vmatprep.subr.mxu0 0.0
        %786 = vmatpush1.msra.mxu0 0.0
        %787 = vmatprep.subr.mxu0 0.0
        %788 = vmatpush1.msra.mxu0 0.0
        %789 = vmatprep.subr.mxu0 0.0
        %790 = vmatpush1.msra.mxu0 0.0
        %791 = vmatprep.subr.mxu0 0.0
        %792 = vmatpush1.msra.mxu0 0.0
        %793 = vmatprep.subr.mxu0 0.0
        %794 = vmatpush1.msra.mxu0 0.0
        %795 = vmatprep.subr.mxu0 0.0
        %796 = vmatpush1.msra.mxu0 0.0
        %797 = vmatprep.mubr.f32.mxu0 0.0
        %798 = vmatmul.mubr.f32.gmra.mrb[0].mxu0 %v727
        %v799 = vpop.f32.mrb[0].mxu0
        %v800 = vadd.f32 0.0, %v799
        %v801 = vpop.f32.mrb[0].mxu0
        %802 = vdwg.mxu0
        %p803 = scmp.eq.s32.totalorder %s25, 0
        // Predicated region
        $region45: #{tpu_custom_call.1} parent=43 // pred_check
          %p804 = pneg %p803
        $region46: #{tpu_custom_call.1} parent=43 // pred_check_branch
          %806 = sbr.rel (%p804) target = $region48
        $region47: #{tpu_custom_call.1} parent=43 // pred_region
          %807 = vst.msk [vmem:[#allocation2] sm:$0xff] %vm341, 0.0
        $region48: #{tpu_custom_call.1} parent=43 // pred_fallthru
          _
        %v808 = vld [vmem:[#allocation2] sm:$0xff]
        %v809 = vadd.f32 %v808, %v800
        %810 = vst.msk [vmem:[#allocation2] sm:$0xff] %vm341, %v809
        %p811 = scmp.eq.s32.totalorder %s25, 7
        // Predicated region
        $region49: #{tpu_custom_call.1} parent=43 // pred_check
          %p812 = pneg %p811
        $region50: #{tpu_custom_call.1} parent=43 // pred_check_branch
          %814 = sbr.rel (%p812) target = $region52
        $region51: #{tpu_custom_call.1} parent=43 // pred_region
          %v815 = vld [vmem:[#allocation2] sm:$0xff]
          %v816 = vld [vmem:[%s5] sm:$0x1]
          %v818 = vlaneseq
          %v819 = vshrl.u32 %v818, 7
          %v820 = vsub.s32 0, %v819
          %v821 = vrot.slane %v816, %v820
          %v823 = vadd.f32 %v815, %v821
          %824 = vst.msk [vmem:[%s312] sm:$0xff] %vm341, %v823
        $region52: #{tpu_custom_call.1} parent=43 // pred_fallthru
          _
        %s825 = sand.u32 %s191, 1
        %s826 = scalar_lea.sflag [#allocation4], %s825
        %s827 = sand.u32 %s191, 1
        %s828 = smul.addr %s827, 8
        %s829 = scalar_lea.vmem [#allocation3], %s828
        // Predicated region
        $region53: #{tpu_custom_call.1} parent=43 // pred_check
          %p830 = pneg %p201
        $region54: #{tpu_custom_call.1} parent=43 // pred_check_branch
          %832 = sbr.rel (%p830) target = $region56
        $region55: #{tpu_custom_call.1} parent=43 // pred_region
          %s834 = ssub.s32 128, 128
          %835 = vsyncadd %s826, %s834
          %s836 = smul.addr %s24, 128
          %s837 = scalar_lea.hbm %s6, %s836
          %s839 = sshll.u32 %s829, 4
          %s840 = int_to_ptr.vmem [resolvable:$true] %s839
          %842 = dma.vmem_to_hbm [thread:$0]  %s840, 128, %s837, %s826
        $region56: #{tpu_custom_call.1} parent=43 // pred_fallthru
          _
      $region44: #{tpu_custom_call.1} parent=5 // pred_fallthru
        _
      %p843 = scmp.le.s32.totalorder 2, %s15
      // Predicated region
      $region57: #{tpu_custom_call.1} parent=5 // pred_check
        %p844 = pneg %p843
      $region58: #{tpu_custom_call.1} parent=5 // pred_check_branch
        %846 = sbr.rel (%p844) target = $region60
      $region59: #{tpu_custom_call.1} parent=5 // pred_region
        %s847 = ssub.s32 %s15, 2
        // Predicated region
        $region61: #{tpu_custom_call.1} parent=59 // pred_check
          %p848 = pneg %p207
        $region62: #{tpu_custom_call.1} parent=59 // pred_check_branch
          %850 = sbr.rel (%p848) target = $region64
        $region63: #{tpu_custom_call.1} parent=59 // pred_region
          %s851 = sand.u32 %s192, 1
          %s852 = scalar_lea.sflag [#allocation4], %s851
          %s853 = sand.u32 %s192, 1
          %s854 = smul.addr %s853, 8
          %s855 = scalar_lea.vmem [#allocation3], %s854
          %856 = dma.done %s852, 128
        $region64: #{tpu_custom_call.1} parent=59 // pred_fallthru
          _
      $region60: #{tpu_custom_call.1} parent=5 // pred_fallthru
        _
    $region6: #{tpu_custom_call.1} parent=1 // loop_footer
      %s19 = sadd.s32 1, %s15
    $region7: #{tpu_custom_call.1} parent=1 // loop_footer_branch
      %14 = sbr.rel target = $region3
    $region8: #{tpu_custom_call.1} parent=1 // loop_exit
      _
    %857 = vsyncpa [#allocation4], 1
    %s858 = scalar_lea.sflag [#allocation4], 1
    %859 = vsyncpa %s858, 1

</llo_original>
